<compile_context>
chip_gen: v6e
topology: v6e:2x2x1
jax: 0.10.0
libtpu: 0.0.40
codegen_flags: <defaults>
</compile_context>

<pallas_src>
import functools

import numpy as np
import jax
import jax.numpy as jnp
from jax.experimental import pallas as pl
from jax.experimental.pallas import tpu as pltpu


# ----------------------------------------------------------------------------
# Pallas kernel: fused (Linear -> ReLU -> Linear -> Sigmoid) + gating multiply
# ----------------------------------------------------------------------------
def slam_kernel(feat_ref, w1_ref, b1w2_ref, b2_ref, out_ref):
    # feat_ref : (TM, HW)  native dtype   feature rows (MLP input + gating target)
    # w1_ref   : (HW, 512) bf16           first linear weight (resize folded in)
    # b1w2_ref : (2, 512)  f32            row 0 = b1, row 1 = w2
    # b2_ref   : (1,)      f32            SMEM scalar
    # out_ref  : (TM, HW)  native dtype
    bw = b1w2_ref[...]                                     # (2, 512) f32

    # MXU in bf16, f32 accumulation. Feed the MXU straight from VMEM (no long
    # f32 live range across the matmul).
    h1 = jnp.dot(feat_ref[...].astype(jnp.bfloat16), w1_ref[...],
                 preferred_element_type=jnp.float32)
    h1 = jnp.maximum(h1 + bw[0:1, :], 0.0)                 # bias + ReLU   (VPU)

    # Second linear has a single output unit -> elementwise mul + lane reduce.
    g = jnp.sum(h1 * bw[1:2, :], axis=-1, keepdims=True) + b2_ref[0]
    g = jax.nn.sigmoid(g)                                  # (TM, 1) f32   (EUP)

    # Re-read the feature tile from VMEM for the gated store (cheap: vld slots).
    out_ref[...] = (feat_ref[...].astype(jnp.float32) * g).astype(out_ref.dtype)


# ----------------------------------------------------------------------------
# Helpers
# ----------------------------------------------------------------------------
def _round_up(x, m):
    return ((x + m - 1) // m) * m


def _resize_matrix_1d(in_size, out_size):
    """1-D align_corners=True linear interpolation matrix A: (out_size, in_size)."""
    A = np.zeros((out_size, in_size), np.float32)
    if out_size == 1:
        A[0, 0] = 1.0                       # torch convention for out==1
        return jnp.asarray(A)
    if in_size == 1:
        A[:, 0] = 1.0
        return jnp.asarray(A)
    coords = np.linspace(0.0, in_size - 1.0, out_size)
    lo = np.clip(np.floor(coords).astype(np.int64), 0, in_size - 1)
    hi = np.clip(lo + 1, 0, in_size - 1)
    frac = (coords - lo).astype(np.float32)
    for i in range(out_size):
        A[i, lo[i]] += 1.0 - frac[i]
        A[i, hi[i]] += frac[i]
    return jnp.asarray(A)


def _tpu_vmem_capacity_bytes():
    """Physical per-core VMEM; conservative fallback if the query is unavailable."""
    try:
        return int(pltpu.get_tpu_info().vmem_capacity_bytes)
    except Exception:
        return 64 * 1024 * 1024             # v7x per-TC size (most restrictive)


def _vmem_limit_bytes():
    """Scoped-VMEM limit: ~100 MiB on 128 MiB chips, ~51 MiB on 64 MiB chips."""
    cap = _tpu_vmem_capacity_bytes()
    return min(100 * 1024 * 1024, int(cap * 0.8))


def _pick_tm(M, HW, act_itemsize, act_budget_bytes):
    """Row tile: largest candidate (up to 2048, multiple of 8) whose
    double-buffered in+out activation blocks fit the budget; capped so the
    grid has >= 2 steps when M allows (v7x megacore sharding)."""
    M8 = _round_up(M, 8)
    row_bytes = 2 * 2 * HW * act_itemsize    # 2 streams (in+out) x 2 buffers
    budget_rows = max(8, act_budget_bytes // row_bytes)
    tm = 8
    for cand in (2048, 1024, 512, 256, 128, 64, 32, 16, 8):
        if cand <= budget_rows and cand <= M8:
            tm = cand
            break
    if M8 >= 16:
        # largest multiple of 8 that is <= M8 / 2  -> at least 2 grid steps
        tm = min(tm, (M8 // 16) * 8)
    return tm


# ----------------------------------------------------------------------------
# Parameter prep (hoisted out of the hot path): fold resize into W1, pack b1/w2
# ----------------------------------------------------------------------------
def slam_prepare(w1, b1, w2, b2, feat_h, feat_w, spatial_dim):
    """Call once per (weight set, feature spatial size); reuse across forwards.

    h1 = resize(feat) @ W1.T = feat_flat @ K.T @ W1.T = feat_flat @ W1_eff
    """
    S = spatial_dim
    w1_t = jnp.asarray(w1, jnp.float32).T                  # (S*S, 512)
    if feat_h != S or feat_w != S:
        K = jnp.kron(_resize_matrix_1d(feat_h, S),
                     _resize_matrix_1d(feat_w, S))          # (S*S, HW)
        w1_eff = K.T @ w1_t                                 # (HW, 512), exact f32 fold
    else:
        w1_eff = w1_t                                       # K = I: dedupe x == feat
    w1_eff = w1_eff.astype(jnp.bfloat16)                    # halve weight bytes

    b1w2 = jnp.stack([jnp.asarray(b1, jnp.float32),
                      jnp.asarray(w2, jnp.float32).reshape(-1)], axis=0)  # (2, 512)
    b2_s = jnp.asarray(b2, jnp.float32).reshape(1)
    return w1_eff, b1w2, b2_s


# ----------------------------------------------------------------------------
# Forward wrapper (native-dtype I/O, generation-aware tiling)
# ----------------------------------------------------------------------------
@jax.jit
def slam_forward(feature, w1_eff, b1w2, b2_s):
    n, c, h, w = feature.shape
    HW = h * w
    M = n * c
    dtype = feature.dtype
    act_itemsize = jnp.dtype(dtype).itemsize

    feat_flat = feature.reshape(M, HW)                      # native dtype, no astype

    vmem_limit = _vmem_limit_bytes()
    weight_bytes = HW * 512 * 2 + 2 * 512 * 4               # W1_eff (bf16) + b1/w2
    act_budget = max(1 * 1024 * 1024, vmem_limit - weight_bytes - 4 * 1024 * 1024)

    TM = _pick_tm(M, HW, act_itemsize, act_budget)
    M_pad = _round_up(M, TM)
    if M_pad != M:
        feat_flat = jnp.pad(feat_flat, ((0, M_pad - M), (0, 0)))
    grid = (M_pad // TM,)

    nhid = b1w2.shape[1]                                    # 512
    cost = pl.CostEstimate(
        flops=2 * M_pad * HW * nhid + 4 * M_pad * nhid + M_pad * HW,
        transcendentals=M_pad,
        bytes_accessed=2 * M_pad * HW * act_itemsize + HW * nhid * 2 + 2 * nhid * 4 + 4,
    )

    out_flat = pl.pallas_call(
        slam_kernel,
        out_shape=jax.ShapeDtypeStruct((M_pad, HW), dtype),
        grid_spec=pltpu.PrefetchScalarGridSpec(
            num_scalar_prefetch=0,
            grid=grid,
            in_specs=[
                pl.BlockSpec((TM, HW), lambda i: (i, 0)),          # feature rows
                pl.BlockSpec((HW, nhid), lambda i: (0, 0),         # W1_eff, resident
                             pipeline_mode=pl.Buffered(1)),
                pl.BlockSpec((2, nhid), lambda i: (0, 0),          # b1 / w2, resident
                             pipeline_mode=pl.Buffered(1)),
                pl.BlockSpec(memory_space=pltpu.MemorySpace.SMEM), # b2 scalar
            ],
            out_specs=pl.BlockSpec((TM, HW), lambda i: (i, 0)),
        ),
        compiler_params=pltpu.CompilerParams(
            dimension_semantics=("parallel",),
            vmem_limit_bytes=vmem_limit,
        ),
        cost_estimate=cost,
    )(feat_flat, w1_eff, b1w2, b2_s)

    if M_pad != M:
        out_flat = out_flat[:M]
    return out_flat.reshape(n, c, h, w)


def slam_apply(feature, w1, b1, w2, b2, spatial_dim):
    """Convenience wrapper: prep (could be cached by the caller) + forward."""
    n, c, h, w = feature.shape
    params = slam_prepare(w1, b1, w2, b2, h, w, spatial_dim)
    return slam_forward(feature, *params)


# ----------------------------------------------------------------------------
# Pure-JAX reference (f32, gather-based resize) for validation
# ----------------------------------------------------------------------------
def bilinear_resize_align_corners(x, out_h, out_w):
    n, c, h, w = x.shape
    if h == out_h and w == out_w:
        return x
    ys = jnp.linspace(0.0, h - 1.0, out_h) if out_h > 1 else jnp.zeros((1,))
    xs = jnp.linspace(0.0, w - 1.0, out_w) if out_w > 1 else jnp.zeros((1,))
    y0 = jnp.clip(jnp.floor(ys).astype(jnp.int32), 0, h - 1)
    x0 = jnp.clip(jnp.floor(xs).astype(jnp.int32), 0, w - 1)
    y1 = jnp.clip(y0 + 1, 0, h - 1)
    x1 = jnp.clip(x0 + 1, 0, w - 1)
    wy = (ys - y0.astype(ys.dtype))[:, None]
    wx = (xs - x0.astype(xs.dtype))[None, :]
    g = lambda yi, xi: x[:, :, yi, :][:, :, :, xi]
    top = g(y0, x0) * (1 - wx) + g(y0, x1) * wx
    bot = g(y1, x0) * (1 - wx) + g(y1, x1) * wx
    return top * (1 - wy) + bot * wy


def slam_reference(feature, w1, b1, w2, b2, spatial_dim):
    n, c, h, w = feature.shape
    feature = feature.astype(jnp.float32)
    S = spatial_dim
    x = bilinear_resize_align_corners(feature, S, S).reshape(n, c, S * S)
    h1 = jnp.maximum(x @ w1.T + b1, 0.0)
    g = jax.nn.sigmoid(h1 @ w2.T + b2)                    # (n, c, 1)
    return g[..., None] * feature


if __name__ == "__main__":
    spatial_dim = 16
    n, c = 2, 4

    key = jax.random.PRNGKey(0)
    k_f1, k_w1, k_b1, k_w2, k_b2, k_f2 = jax.random.split(key, 6)

    # nn.Linear(spatial_dim**2, 512): weight (512, 256), bias (512,)
    w1 = jax.random.normal(k_w1, (512, spatial_dim ** 2), dtype=jnp.float32) * 0.02
    b1 = jax.random.normal(k_b1, (512,), dtype=jnp.float32) * 0.02
    # nn.Linear(512, 1): weight (1, 512), bias (1,)
    w2 = jax.random.normal(k_w2, (1, 512), dtype=jnp.float32) * 0.02
    b2 = jax.random.normal(k_b2, (1,), dtype=jnp.float32) * 0.02

    # Case 1: h == spatial_dim (no resize path), f32 I/O
    feature = jax.random.normal(k_f1, (n, c, 16, 16), dtype=jnp.float32)
    out = jax.block_until_ready(slam_apply(feature, w1, b1, w2, b2, spatial_dim))
    ref = slam_reference(feature, w1, b1, w2, b2, spatial_dim)
    assert out.shape == feature.shape and out.dtype == feature.dtype
    assert jnp.allclose(out, ref, atol=1e-2, rtol=1e-2), \
        f"mismatch (no-resize f32): {float(jnp.max(jnp.abs(out - ref)))}"

    # Case 2: h != spatial_dim (bilinear resize folded into W1), f32 I/O
    feature2 = jax.random.normal(k_f2, (n, c, 8, 8), dtype=jnp.float32)
    out2 = jax.block_until_ready(slam_apply(feature2, w1, b1, w2, b2, spatial_dim))
    ref2 = slam_reference(feature2, w1, b1, w2, b2, spatial_dim)
    assert out2.shape == feature2.shape and out2.dtype == feature2.dtype
    assert jnp.allclose(out2, ref2, atol=1e-2, rtol=1e-2), \
        f"mismatch (resize f32): {float(jnp.max(jnp.abs(out2 - ref2)))}"

    # Case 3: bf16 feature -> bf16 output (native-dtype I/O path)
    feature3 = feature.astype(jnp.bfloat16)
    out3 = jax.block_until_ready(slam_apply(feature3, w1, b1, w2, b2, spatial_dim))
    ref3 = slam_reference(feature3, w1, b1, w2, b2, spatial_dim)
    assert out3.shape == feature3.shape and out3.dtype == jnp.bfloat16
    assert jnp.allclose(out3.astype(jnp.float32), ref3, atol=5e-2, rtol=5e-2), \
        f"mismatch (bf16): {float(jnp.max(jnp.abs(out3.astype(jnp.float32) - ref3)))}"

    print("KERNEL_OK")
</pallas_src>

<mosaic_0001>
module attributes {stable_mosaic.version = 11 : i64} {
  func.func @slam_kernel(%arg0: i32, %arg1: memref<8x256xf32, #tpu.memory_space<vmem>>, %arg2: memref<256x512xbf16, #tpu.memory_space<vmem>>, %arg3: memref<2x512xf32, #tpu.memory_space<vmem>>, %arg4: memref<1xf32, #tpu.memory_space<smem>>, %arg5: memref<8x256xf32, #tpu.memory_space<vmem>>) attributes {dimension_semantics = [#tpu.dimension_semantics<parallel>], iteration_bounds = array<i64: 1>, scalar_prefetch = 0 : i64, scratch_operands = 0 : i64, tpu.core_type = #tpu.core_type<tc>, window_params = [{transform_indices = @transform_0, window_bounds = array<i64: 8, 256>}, {pipeline_mode = #tpu.pipeline_mode<synchronous>, transform_indices = @transform_1, window_bounds = array<i64: 256, 512>}, {pipeline_mode = #tpu.pipeline_mode<synchronous>, transform_indices = @transform_2, window_bounds = array<i64: 2, 512>}, {transform_indices = @transform_3, window_bounds = array<i64: 1>}, {transform_indices = @transform_4, window_bounds = array<i64: 8, 256>}]} {
    %c0 = arith.constant 0 : index
    %c0_0 = arith.constant 0 : index
    %0 = vector.load %arg3[%c0, %c0_0] : memref<2x512xf32, #tpu.memory_space<vmem>>, vector<2x512xf32>
    %c0_1 = arith.constant 0 : index
    %c0_2 = arith.constant 0 : index
    %1 = vector.load %arg1[%c0_1, %c0_2] : memref<8x256xf32, #tpu.memory_space<vmem>>, vector<8x256xf32>
    %2 = arith.truncf %1 : vector<8x256xf32> to vector<8x256xbf16>
    %c0_3 = arith.constant 0 : index
    %c0_4 = arith.constant 0 : index
    %3 = vector.load %arg2[%c0_3, %c0_4] : memref<256x512xbf16, #tpu.memory_space<vmem>>, vector<256x512xbf16>
    %cst = arith.constant dense<0.000000e+00> : vector<8x512xf32>
    %4 = tpu.matmul %2, %3, %cst {dimension_numbers = #tpu.dot_dimension_numbers<[1], [0], [0], [1], [0, 0, 1, 1], [], []>} : vector<8x256xbf16>, vector<256x512xbf16>, vector<8x512xf32> -> vector<8x512xf32>
    %5 = vector.extract_strided_slice %0 {offsets = [0, 0], sizes = [1, 512], strides = [1, 1]} : vector<2x512xf32> to vector<1x512xf32>
    %6 = vector.broadcast %5 : vector<1x512xf32> to vector<8x512xf32>
    %7 = arith.addf %4, %6 : vector<8x512xf32>
    %cst_5 = arith.constant 0.000000e+00 : f32
    %8 = vector.broadcast %cst_5 : f32 to vector<8x512xf32>
    %9 = arith.maximumf %7, %8 : vector<8x512xf32>
    %10 = vector.extract_strided_slice %0 {offsets = [1, 0], sizes = [1, 512], strides = [1, 1]} : vector<2x512xf32> to vector<1x512xf32>
    %11 = vector.broadcast %10 : vector<1x512xf32> to vector<8x512xf32>
    %12 = arith.mulf %9, %11 : vector<8x512xf32>
    %cst_6 = arith.constant dense<0.000000e+00> : vector<8xf32>
    %13 = vector.multi_reduction <add>, %12, %cst_6 [1] : vector<8x512xf32> to vector<8xf32>
    %14 = vector.shape_cast %13 : vector<8xf32> to vector<8x1xf32>
    %c0_7 = arith.constant 0 : index
    %15 = memref.load %arg4[%c0_7] : memref<1xf32, #tpu.memory_space<smem>>
    %16 = vector.broadcast %15 : f32 to vector<8x1xf32>
    %17 = arith.addf %14, %16 : vector<8x1xf32>
    %18 = arith.negf %17 : vector<8x1xf32>
    %19 = math.exp %18 : vector<8x1xf32>
    %cst_8 = arith.constant 1.000000e+00 : f32
    %20 = vector.broadcast %cst_8 : f32 to vector<8x1xf32>
    %21 = arith.addf %20, %19 : vector<8x1xf32>
    %22 = arith.divf %20, %21 : vector<8x1xf32>
    %c0_9 = arith.constant 0 : index
    %c0_10 = arith.constant 0 : index
    %23 = vector.load %arg1[%c0_9, %c0_10] : memref<8x256xf32, #tpu.memory_space<vmem>>, vector<8x256xf32>
    %24 = vector.broadcast %22 : vector<8x1xf32> to vector<8x256xf32>
    %25 = arith.mulf %23, %24 : vector<8x256xf32>
    %c0_11 = arith.constant 0 : index
    %c0_12 = arith.constant 0 : index
    %26 = vector.load %arg5[%c0_11, %c0_12] : memref<8x256xf32, #tpu.memory_space<vmem>>, vector<8x256xf32>
    tpu.vector_store %arg5[%c0_11, %c0_12], %25 {strides = array<i32>} : memref<8x256xf32, #tpu.memory_space<vmem>>, vector<8x256xf32>,
    return
  }
  func.func @transform_0(%arg0: i32) -> (i32, i32) {
    %c0_i32 = arith.constant 0 : i32
    %c0_i32_0 = arith.constant 0 : i32
    return %arg0, %c0_i32 : i32, i32
  }
  func.func @transform_1(%arg0: i32) -> (i32, i32) {
    %c0_i32 = arith.constant 0 : i32
    %c0_i32_0 = arith.constant 0 : i32
    %c0_i32_1 = arith.constant 0 : i32
    return %c0_i32, %c0_i32_0 : i32, i32
  }
  func.func @transform_2(%arg0: i32) -> (i32, i32) {
    %c0_i32 = arith.constant 0 : i32
    %c0_i32_0 = arith.constant 0 : i32
    %c0_i32_1 = arith.constant 0 : i32
    return %c0_i32, %c0_i32_0 : i32, i32
  }
  func.func @transform_3(%arg0: i32) -> i32 {
    %c0_i32 = arith.constant 0 : i32
    %c0_i32_0 = arith.constant 0 : i32
    return %c0_i32 : i32
  }
  func.func @transform_4(%arg0: i32) -> (i32, i32) {
    %c0_i32 = arith.constant 0 : i32
    %c0_i32_0 = arith.constant 0 : i32
    return %arg0, %c0_i32 : i32, i32
  }
}

</mosaic_0001>

<llo_original>
// kernel: slam_forward.1
$region0: #{slam_forward.1}
  #allocation0 [shape = 'u32[]', space=smem, size = 0x4, offset = 0x4, fixed_abs, tag = 'smem constant byte address 0x4 - core index']
  #allocation1 [shape = 'u32[144,128]{1,0:T(1,128)}', space=vmem, size = 0x12000, scoped, tag = 'internal scratch']
  #allocation2 [shape = 'f32[1]{0:T(128)S(6)}', space=smem, size = 0x200, scoped, tag = 'scoped memory for slam_forward.1']
  %s0 = inlined_call_operand.vmem [shape: f32[8,256], index: 0, kind: input, shape index: {}]
  %s1 = inlined_call_operand.hbm [shape: bf16[256,512], index: 1, kind: input, shape index: {}]
  %s2 = inlined_call_operand.vmem [shape: f32[2,512], index: 2, kind: input, shape index: {}]
  %s3 = inlined_call_operand.<no memory space> [shape: f32[1], index: 3, kind: input, shape index: {}]
  %s4 = inlined_call_operand.vmem [shape: f32[8,256], index: 4, kind: output, shape index: {}]
  %s5 = sld [smem:[#allocation0]]
  $region30: #{slam_forward.1} parent=0
    _
  %s7 = ssub.s32 1, %s5
  %s8 = scalar_select 0, %s7, %s5
  %9 = sst [smem:[#allocation2]] %s3
  $region1: #{slam_forward.1} parent=0
    #allocation3 [shape = 'u8[262144]{0}', space=vmem, size = 0x40000, scoped, tag = 'input window, operand 1, single buffered']
    #allocation4 [shape = 's32[1]{0}', space=sflag, size = 0x4, scoped, tag = 'scoped memory for slam_forward.1']
    %10 = vsyncpa [#allocation4], 0
    // Predicated region
    $region2: #{slam_forward.1} parent=1 // pred_check
      _
    $region3: #{slam_forward.1} parent=1 // pred_check_branch
      %12 = sbr.rel (0) target = $region5
    $region4: #{slam_forward.1} parent=1 // pred_region
      _
    $region5: #{slam_forward.1} parent=1 // pred_fallthru
      _
    // Predicated region
    $region6: #{slam_forward.1} parent=1 // pred_check
      _
    $region7: #{slam_forward.1} parent=1 // pred_check_branch
      %14 = sbr.rel (0) target = $region9
    $region8: #{slam_forward.1} parent=1 // pred_region
      %s16 = ssub.s32 8192, 8192
      %17 = vsyncadd [#allocation4], %s16
      %s18 = sshll.u32 [#allocation3], 4
      %s19 = int_to_ptr.vmem [resolvable:$true] %s18
      %24 = dma.hbm_to_vmem [thread:$0]  %s1, 8192, %s19, [#allocation4], 256, 256, 16
    $region9: #{slam_forward.1} parent=1 // pred_fallthru
      _
    // Predicated region
    $region10: #{slam_forward.1} parent=1 // pred_check
      _
    $region11: #{slam_forward.1} parent=1 // pred_check_branch
      %26 = sbr.rel (0) target = $region13
    $region12: #{slam_forward.1} parent=1 // pred_region
      _
    $region13: #{slam_forward.1} parent=1 // pred_fallthru
      _
    // Predicated region
    $region14: #{slam_forward.1} parent=1 // pred_check
      _
    $region15: #{slam_forward.1} parent=1 // pred_check_branch
      %28 = sbr.rel (0) target = $region17
    $region16: #{slam_forward.1} parent=1 // pred_region
      _
    $region17: #{slam_forward.1} parent=1 // pred_fallthru
      _
    // Predicated region
    $region18: #{slam_forward.1} parent=1 // pred_check
      _
    $region19: #{slam_forward.1} parent=1 // pred_check_branch
      %30 = sbr.rel (0) target = $region21
    $region20: #{slam_forward.1} parent=1 // pred_region
      %31 = dma.done [#allocation4], 8192
    $region21: #{slam_forward.1} parent=1 // pred_fallthru
      _
    %v32 = vld [vmem:[%s2] sm:$0xff]
    %v33 = vld [vmem:[%s0] sm:$0xff]
    %v34 = vld [vmem:[%s0 + $0x8] sm:$0xff]
    %v35 = vpack.c.bf16 %v33, %v33
    %v36 = vpack.c.bf16 %v34, %v34
    %v37 = vld [vmem:[#allocation3] sm:$0xff]
    %v38 = vld [vmem:[#allocation3 + $0x8] sm:$0xff]
    %v39 = vld [vmem:[#allocation3 + $0x10] sm:$0xff]
    %v40 = vld [vmem:[#allocation3 + $0x18] sm:$0xff]
    %v41 = vld [vmem:[#allocation3 + $0x20] sm:$0xff]
    %v42 = vld [vmem:[#allocation3 + $0x28] sm:$0xff]
    %v43 = vld [vmem:[#allocation3 + $0x30] sm:$0xff]
    %v44 = vld [vmem:[#allocation3 + $0x38] sm:$0xff]
    %v45 = vld [vmem:[#allocation3 + $0x40] sm:$0xff]
    %v46 = vld [vmem:[#allocation3 + $0x48] sm:$0xff]
    %v47 = vld [vmem:[#allocation3 + $0x50] sm:$0xff]
    %v48 = vld [vmem:[#allocation3 + $0x58] sm:$0xff]
    %v49 = vld [vmem:[#allocation3 + $0x60] sm:$0xff]
    %v50 = vld [vmem:[#allocation3 + $0x68] sm:$0xff]
    %v51 = vld [vmem:[#allocation3 + $0x70] sm:$0xff]
    %v52 = vld [vmem:[#allocation3 + $0x78] sm:$0xff]
    %v53 = vld [vmem:[#allocation3 + $0x80] sm:$0xff]
    %v54 = vld [vmem:[#allocation3 + $0x88] sm:$0xff]
    %v55 = vld [vmem:[#allocation3 + $0x90] sm:$0xff]
    %v56 = vld [vmem:[#allocation3 + $0x98] sm:$0xff]
    %v57 = vld [vmem:[#allocation3 + $0xa0] sm:$0xff]
    %v58 = vld [vmem:[#allocation3 + $0xa8] sm:$0xff]
    %v59 = vld [vmem:[#allocation3 + $0xb0] sm:$0xff]
    %v60 = vld [vmem:[#allocation3 + $0xb8] sm:$0xff]
    %v61 = vld [vmem:[#allocation3 + $0xc0] sm:$0xff]
    %v62 = vld [vmem:[#allocation3 + $0xc8] sm:$0xff]
    %v63 = vld [vmem:[#allocation3 + $0xd0] sm:$0xff]
    %v64 = vld [vmem:[#allocation3 + $0xd8] sm:$0xff]
    %v65 = vld [vmem:[#allocation3 + $0xe0] sm:$0xff]
    %v66 = vld [vmem:[#allocation3 + $0xe8] sm:$0xff]
    %v67 = vld [vmem:[#allocation3 + $0xf0] sm:$0xff]
    %v68 = vld [vmem:[#allocation3 + $0xf8] sm:$0xff]
    %v69 = vld [vmem:[#allocation3 + $0x100] sm:$0xff]
    %v70 = vld [vmem:[#allocation3 + $0x108] sm:$0xff]
    %v71 = vld [vmem:[#allocation3 + $0x110] sm:$0xff]
    %v72 = vld [vmem:[#allocation3 + $0x118] sm:$0xff]
    %v73 = vld [vmem:[#allocation3 + $0x120] sm:$0xff]
    %v74 = vld [vmem:[#allocation3 + $0x128] sm:$0xff]
    %v75 = vld [vmem:[#allocation3 + $0x130] sm:$0xff]
    %v76 = vld [vmem:[#allocation3 + $0x138] sm:$0xff]
    %v77 = vld [vmem:[#allocation3 + $0x140] sm:$0xff]
    %v78 = vld [vmem:[#allocation3 + $0x148] sm:$0xff]
    %v79 = vld [vmem:[#allocation3 + $0x150] sm:$0xff]
    %v80 = vld [vmem:[#allocation3 + $0x158] sm:$0xff]
    %v81 = vld [vmem:[#allocation3 + $0x160] sm:$0xff]
    %v82 = vld [vmem:[#allocation3 + $0x168] sm:$0xff]
    %v83 = vld [vmem:[#allocation3 + $0x170] sm:$0xff]
    %v84 = vld [vmem:[#allocation3 + $0x178] sm:$0xff]
    %v85 = vld [vmem:[#allocation3 + $0x180] sm:$0xff]
    %v86 = vld [vmem:[#allocation3 + $0x188] sm:$0xff]
    %v87 = vld [vmem:[#allocation3 + $0x190] sm:$0xff]
    %v88 = vld [vmem:[#allocation3 + $0x198] sm:$0xff]
    %v89 = vld [vmem:[#allocation3 + $0x1a0] sm:$0xff]
    %v90 = vld [vmem:[#allocation3 + $0x1a8] sm:$0xff]
    %v91 = vld [vmem:[#allocation3 + $0x1b0] sm:$0xff]
    %v92 = vld [vmem:[#allocation3 + $0x1b8] sm:$0xff]
    %v93 = vld [vmem:[#allocation3 + $0x1c0] sm:$0xff]
    %v94 = vld [vmem:[#allocation3 + $0x1c8] sm:$0xff]
    %v95 = vld [vmem:[#allocation3 + $0x1d0] sm:$0xff]
    %v96 = vld [vmem:[#allocation3 + $0x1d8] sm:$0xff]
    %v97 = vld [vmem:[#allocation3 + $0x1e0] sm:$0xff]
    %v98 = vld [vmem:[#allocation3 + $0x1e8] sm:$0xff]
    %v99 = vld [vmem:[#allocation3 + $0x1f0] sm:$0xff]
    %v100 = vld [vmem:[#allocation3 + $0x1f8] sm:$0xff]
    %v102 = vlaneseq
    %v103 = vshrl.u32 %v102, 7
    %v104 = vsub.s32 0, %v103
    %v105 = vrot.slane %v32, %v104
    %v106 = vlaneseq
    %v107 = vshrl.u32 %v106, 7
    %v108 = vsub.s32 2, %v107
    %v109 = vrot.slane %v32, %v108
    %v110 = vlaneseq
    %v111 = vshrl.u32 %v110, 7
    %v112 = vsub.s32 4, %v111
    %v113 = vrot.slane %v32, %v112
    %v114 = vlaneseq
    %v115 = vshrl.u32 %v114, 7
    %v116 = vsub.s32 6, %v115
    %v117 = vrot.slane %v32, %v116
    %v122 = vlaneseq
    %v123 = vshrl.u32 %v122, 7
    %v124 = vsub.s32 0, %v123
    %v125 = vrot.slane %v105, %v124
    %v126 = vlaneseq
    %v127 = vshrl.u32 %v126, 7
    %v128 = vsub.s32 0, %v127
    %v129 = vrot.slane %v109, %v128
    %v130 = vlaneseq
    %v131 = vshrl.u32 %v130, 7
    %v132 = vsub.s32 0, %v131
    %v133 = vrot.slane %v113, %v132
    %v134 = vlaneseq
    %v135 = vshrl.u32 %v134, 7
    %v136 = vsub.s32 0, %v135
    %v137 = vrot.slane %v117, %v136
    %v202 = vunpack.c.l.b16 %v37
    %v203 = vunpack.c.h.b16 %v37
    %v204 = vunpack.c.l.b16 %v38
    %v205 = vunpack.c.h.b16 %v38
    %v206 = vunpack.c.l.b16 %v39
    %v207 = vunpack.c.h.b16 %v39
    %v208 = vunpack.c.l.b16 %v40
    %v209 = vunpack.c.h.b16 %v40
    %v210 = vunpack.c.l.b16 %v41
    %v211 = vunpack.c.h.b16 %v41
    %v212 = vunpack.c.l.b16 %v42
    %v213 = vunpack.c.h.b16 %v42
    %v214 = vunpack.c.l.b16 %v43
    %v215 = vunpack.c.h.b16 %v43
    %v216 = vunpack.c.l.b16 %v44
    %v217 = vunpack.c.h.b16 %v44
    %v218 = vunpack.c.l.b16 %v45
    %v219 = vunpack.c.h.b16 %v45
    %v220 = vunpack.c.l.b16 %v46
    %v221 = vunpack.c.h.b16 %v46
    %v222 = vunpack.c.l.b16 %v47
    %v223 = vunpack.c.h.b16 %v47
    %v224 = vunpack.c.l.b16 %v48
    %v225 = vunpack.c.h.b16 %v48
    %v226 = vunpack.c.l.b16 %v49
    %v227 = vunpack.c.h.b16 %v49
    %v228 = vunpack.c.l.b16 %v50
    %v229 = vunpack.c.h.b16 %v50
    %v230 = vunpack.c.l.b16 %v51
    %v231 = vunpack.c.h.b16 %v51
    %v232 = vunpack.c.l.b16 %v52
    %v233 = vunpack.c.h.b16 %v52
    %v234 = vunpack.c.l.b16 %v53
    %v235 = vunpack.c.h.b16 %v53
    %v236 = vunpack.c.l.b16 %v54
    %v237 = vunpack.c.h.b16 %v54
    %v238 = vunpack.c.l.b16 %v55
    %v239 = vunpack.c.h.b16 %v55
    %v240 = vunpack.c.l.b16 %v56
    %v241 = vunpack.c.h.b16 %v56
    %v242 = vunpack.c.l.b16 %v57
    %v243 = vunpack.c.h.b16 %v57
    %v244 = vunpack.c.l.b16 %v58
    %v245 = vunpack.c.h.b16 %v58
    %v246 = vunpack.c.l.b16 %v59
    %v247 = vunpack.c.h.b16 %v59
    %v248 = vunpack.c.l.b16 %v60
    %v249 = vunpack.c.h.b16 %v60
    %v250 = vunpack.c.l.b16 %v61
    %v251 = vunpack.c.h.b16 %v61
    %v252 = vunpack.c.l.b16 %v62
    %v253 = vunpack.c.h.b16 %v62
    %v254 = vunpack.c.l.b16 %v63
    %v255 = vunpack.c.h.b16 %v63
    %v256 = vunpack.c.l.b16 %v64
    %v257 = vunpack.c.h.b16 %v64
    %v258 = vunpack.c.l.b16 %v65
    %v259 = vunpack.c.h.b16 %v65
    %v260 = vunpack.c.l.b16 %v66
    %v261 = vunpack.c.h.b16 %v66
    %v262 = vunpack.c.l.b16 %v67
    %v263 = vunpack.c.h.b16 %v67
    %v264 = vunpack.c.l.b16 %v68
    %v265 = vunpack.c.h.b16 %v68
    %v266 = vunpack.c.l.b16 %v69
    %v267 = vunpack.c.h.b16 %v69
    %v268 = vunpack.c.l.b16 %v70
    %v269 = vunpack.c.h.b16 %v70
    %v270 = vunpack.c.l.b16 %v71
    %v271 = vunpack.c.h.b16 %v71
    %v272 = vunpack.c.l.b16 %v72
    %v273 = vunpack.c.h.b16 %v72
    %v274 = vunpack.c.l.b16 %v73
    %v275 = vunpack.c.h.b16 %v73
    %v276 = vunpack.c.l.b16 %v74
    %v277 = vunpack.c.h.b16 %v74
    %v278 = vunpack.c.l.b16 %v75
    %v279 = vunpack.c.h.b16 %v75
    %v280 = vunpack.c.l.b16 %v76
    %v281 = vunpack.c.h.b16 %v76
    %v282 = vunpack.c.l.b16 %v77
    %v283 = vunpack.c.h.b16 %v77
    %v284 = vunpack.c.l.b16 %v78
    %v285 = vunpack.c.h.b16 %v78
    %v286 = vunpack.c.l.b16 %v79
    %v287 = vunpack.c.h.b16 %v79
    %v288 = vunpack.c.l.b16 %v80
    %v289 = vunpack.c.h.b16 %v80
    %v290 = vunpack.c.l.b16 %v81
    %v291 = vunpack.c.h.b16 %v81
    %v292 = vunpack.c.l.b16 %v82
    %v293 = vunpack.c.h.b16 %v82
    %v294 = vunpack.c.l.b16 %v83
    %v295 = vunpack.c.h.b16 %v83
    %v296 = vunpack.c.l.b16 %v84
    %v297 = vunpack.c.h.b16 %v84
    %v298 = vunpack.c.l.b16 %v85
    %v299 = vunpack.c.h.b16 %v85
    %v300 = vunpack.c.l.b16 %v86
    %v301 = vunpack.c.h.b16 %v86
    %v302 = vunpack.c.l.b16 %v87
    %v303 = vunpack.c.h.b16 %v87
    %v304 = vunpack.c.l.b16 %v88
    %v305 = vunpack.c.h.b16 %v88
    %v306 = vunpack.c.l.b16 %v89
    %v307 = vunpack.c.h.b16 %v89
    %v308 = vunpack.c.l.b16 %v90
    %v309 = vunpack.c.h.b16 %v90
    %v310 = vunpack.c.l.b16 %v91
    %v311 = vunpack.c.h.b16 %v91
    %v312 = vunpack.c.l.b16 %v92
    %v313 = vunpack.c.h.b16 %v92
    %v314 = vunpack.c.l.b16 %v93
    %v315 = vunpack.c.h.b16 %v93
    %v316 = vunpack.c.l.b16 %v94
    %v317 = vunpack.c.h.b16 %v94
    %v318 = vunpack.c.l.b16 %v95
    %v319 = vunpack.c.h.b16 %v95
    %v320 = vunpack.c.l.b16 %v96
    %v321 = vunpack.c.h.b16 %v96
    %v322 = vunpack.c.l.b16 %v97
    %v323 = vunpack.c.h.b16 %v97
    %v324 = vunpack.c.l.b16 %v98
    %v325 = vunpack.c.h.b16 %v98
    %v326 = vunpack.c.l.b16 %v99
    %v327 = vunpack.c.h.b16 %v99
    %v328 = vunpack.c.l.b16 %v100
    %v329 = vunpack.c.h.b16 %v100
    %v330 = vpack.c.b16 %v206, %v202
    %v331 = vpack.c.b16 %v207, %v203
    %v332 = vpack.c.b16 %v208, %v204
    %v333 = vpack.c.b16 %v209, %v205
    %v334 = vpack.c.b16 %v214, %v210
    %v335 = vpack.c.b16 %v215, %v211
    %v336 = vpack.c.b16 %v216, %v212
    %v337 = vpack.c.b16 %v217, %v213
    %v338 = vpack.c.b16 %v222, %v218
    %v339 = vpack.c.b16 %v223, %v219
    %v340 = vpack.c.b16 %v224, %v220
    %v341 = vpack.c.b16 %v225, %v221
    %v342 = vpack.c.b16 %v230, %v226
    %v343 = vpack.c.b16 %v231, %v227
    %v344 = vpack.c.b16 %v232, %v228
    %v345 = vpack.c.b16 %v233, %v229
    %v346 = vpack.c.b16 %v238, %v234
    %v347 = vpack.c.b16 %v239, %v235
    %v348 = vpack.c.b16 %v240, %v236
    %v349 = vpack.c.b16 %v241, %v237
    %v350 = vpack.c.b16 %v246, %v242
    %v351 = vpack.c.b16 %v247, %v243
    %v352 = vpack.c.b16 %v248, %v244
    %v353 = vpack.c.b16 %v249, %v245
    %v354 = vpack.c.b16 %v254, %v250
    %v355 = vpack.c.b16 %v255, %v251
    %v356 = vpack.c.b16 %v256, %v252
    %v357 = vpack.c.b16 %v257, %v253
    %v358 = vpack.c.b16 %v262, %v258
    %v359 = vpack.c.b16 %v263, %v259
    %v360 = vpack.c.b16 %v264, %v260
    %v361 = vpack.c.b16 %v265, %v261
    %v362 = vpack.c.b16 %v270, %v266
    %v363 = vpack.c.b16 %v271, %v267
    %v364 = vpack.c.b16 %v272, %v268
    %v365 = vpack.c.b16 %v273, %v269
    %v366 = vpack.c.b16 %v278, %v274
    %v367 = vpack.c.b16 %v279, %v275
    %v368 = vpack.c.b16 %v280, %v276
    %v369 = vpack.c.b16 %v281, %v277
    %v370 = vpack.c.b16 %v286, %v282
    %v371 = vpack.c.b16 %v287, %v283
    %v372 = vpack.c.b16 %v288, %v284
    %v373 = vpack.c.b16 %v289, %v285
    %v374 = vpack.c.b16 %v294, %v290
    %v375 = vpack.c.b16 %v295, %v291
    %v376 = vpack.c.b16 %v296, %v292
    %v377 = vpack.c.b16 %v297, %v293
    %v378 = vpack.c.b16 %v302, %v298
    %v379 = vpack.c.b16 %v303, %v299
    %v380 = vpack.c.b16 %v304, %v300
    %v381 = vpack.c.b16 %v305, %v301
    %v382 = vpack.c.b16 %v310, %v306
    %v383 = vpack.c.b16 %v311, %v307
    %v384 = vpack.c.b16 %v312, %v308
    %v385 = vpack.c.b16 %v313, %v309
    %v386 = vpack.c.b16 %v318, %v314
    %v387 = vpack.c.b16 %v319, %v315
    %v388 = vpack.c.b16 %v320, %v316
    %v389 = vpack.c.b16 %v321, %v317
    %v390 = vpack.c.b16 %v326, %v322
    %v391 = vpack.c.b16 %v327, %v323
    %v392 = vpack.c.b16 %v328, %v324
    %v393 = vpack.c.b16 %v329, %v325
    %458 = vmatprep.subr.bf16.mxu0 %v359
    %459 = vmatpush1.bf16.msra.mxu0 %v358
    %460 = vmatprep.subr.bf16.mxu0 %v355
    %461 = vmatpush1.bf16.msra.mxu0 %v354
    %462 = vmatprep.subr.bf16.mxu0 %v351
    %463 = vmatpush1.bf16.msra.mxu0 %v350
    %464 = vmatprep.subr.bf16.mxu0 %v347
    %465 = vmatpush1.bf16.msra.mxu0 %v346
    %466 = vmatprep.subr.bf16.mxu0 %v343
    %467 = vmatpush1.bf16.msra.mxu0 %v342
    %468 = vmatprep.subr.bf16.mxu0 %v339
    %469 = vmatpush1.bf16.msra.mxu0 %v338
    %470 = vmatprep.subr.bf16.mxu0 %v335
    %471 = vmatpush1.bf16.msra.mxu0 %v334
    %472 = vmatprep.subr.bf16.mxu0 %v331
    %473 = vmatpush1.bf16.msra.mxu0 %v330
    %474 = vmatprep.subr.bf16.mxu0 %v391
    %475 = vmatpush2.bf16.msra.mxu0 %v390
    %476 = vmatprep.subr.bf16.mxu0 %v387
    %477 = vmatpush2.bf16.msra.mxu0 %v386
    %478 = vmatprep.subr.bf16.mxu0 %v383
    %479 = vmatpush2.bf16.msra.mxu0 %v382
    %480 = vmatprep.subr.bf16.mxu0 %v379
    %481 = vmatpush2.bf16.msra.mxu0 %v378
    %482 = vmatprep.subr.bf16.mxu0 %v375
    %483 = vmatpush2.bf16.msra.mxu0 %v374
    %484 = vmatprep.subr.bf16.mxu0 %v371
    %485 = vmatpush2.bf16.msra.mxu0 %v370
    %486 = vmatprep.subr.bf16.mxu0 %v367
    %487 = vmatpush2.bf16.msra.mxu0 %v366
    %488 = vmatprep.subr.bf16.mxu0 %v363
    %489 = vmatpush2.bf16.msra.mxu0 %v362
    %490 = vmatprep.mubr.bf16.mxu0 %v36
    %491 = vmatmul.mubr.bf16.gmra.mxu0 %v35
    %v492 = vpop.f32.mrf.mxu0
    %v493 = vadd.f32 %v125, %v492
    %v494 = vpop.f32.mrf.mxu0
    %v495 = vadd.f32 %v129, %v494
    %v496 = vpop.f32.mrf.mxu0
    %v497 = vpop.f32.mrf.mxu0
    %498 = vdwg.mxu0
    %499 = vmatprep.subr.bf16.mxu0 %v361
    %500 = vmatpush1.bf16.msra.mxu0 %v360
    %501 = vmatprep.subr.bf16.mxu0 %v357
    %502 = vmatpush1.bf16.msra.mxu0 %v356
    %503 = vmatprep.subr.bf16.mxu0 %v353
    %504 = vmatpush1.bf16.msra.mxu0 %v352
    %505 = vmatprep.subr.bf16.mxu0 %v349
    %506 = vmatpush1.bf16.msra.mxu0 %v348
    %507 = vmatprep.subr.bf16.mxu0 %v345
    %508 = vmatpush1.bf16.msra.mxu0 %v344
    %509 = vmatprep.subr.bf16.mxu0 %v341
    %510 = vmatpush1.bf16.msra.mxu0 %v340
    %511 = vmatprep.subr.bf16.mxu0 %v337
    %512 = vmatpush1.bf16.msra.mxu0 %v336
    %513 = vmatprep.subr.bf16.mxu0 %v333
    %514 = vmatpush1.bf16.msra.mxu0 %v332
    %515 = vmatprep.subr.bf16.mxu0 %v393
    %516 = vmatpush2.bf16.msra.mxu0 %v392
    %517 = vmatprep.subr.bf16.mxu0 %v389
    %518 = vmatpush2.bf16.msra.mxu0 %v388
    %519 = vmatprep.subr.bf16.mxu0 %v385
    %520 = vmatpush2.bf16.msra.mxu0 %v384
    %521 = vmatprep.subr.bf16.mxu0 %v381
    %522 = vmatpush2.bf16.msra.mxu0 %v380
    %523 = vmatprep.subr.bf16.mxu0 %v377
    %524 = vmatpush2.bf16.msra.mxu0 %v376
    %525 = vmatprep.subr.bf16.mxu0 %v373
    %526 = vmatpush2.bf16.msra.mxu0 %v372
    %527 = vmatprep.subr.bf16.mxu0 %v369
    %528 = vmatpush2.bf16.msra.mxu0 %v368
    %529 = vmatprep.subr.bf16.mxu0 %v365
    %530 = vmatpush2.bf16.msra.mxu0 %v364
    %531 = vmatprep.mubr.bf16.mxu0 %v36
    %532 = vmatmul.mubr.bf16.gmra.mxu0 %v35
    %v533 = vpop.f32.mrf.mxu0
    %v534 = vadd.f32 %v133, %v533
    %v535 = vpop.f32.mrf.mxu0
    %v536 = vadd.f32 %v137, %v535
    %v537 = vpop.f32.mrf.mxu0
    %v538 = vpop.f32.mrf.mxu0
    %539 = vdwg.mxu0
    %v540 = vmax.f32 %v493, 0.0
    %v541 = vmax.f32 %v495, 0.0
    %v542 = vmax.f32 %v534, 0.0
    %v543 = vmax.f32 %v536, 0.0
    %v544 = vlaneseq
    %v545 = vshrl.u32 %v544, 7
    %v546 = vsub.s32 1, %v545
    %v547 = vrot.slane %v32, %v546
    %v548 = vlaneseq
    %v549 = vshrl.u32 %v548, 7
    %v550 = vsub.s32 3, %v549
    %v551 = vrot.slane %v32, %v550
    %v552 = vlaneseq
    %v553 = vshrl.u32 %v552, 7
    %v554 = vsub.s32 5, %v553
    %v555 = vrot.slane %v32, %v554
    %v556 = vlaneseq
    %v557 = vshrl.u32 %v556, 7
    %v558 = vsub.s32 7, %v557
    %v559 = vrot.slane %v32, %v558
    %v564 = vlaneseq
    %v565 = vshrl.u32 %v564, 7
    %v566 = vsub.s32 1, %v565
    %v567 = vrot.slane %v547, %v566
    %v568 = vlaneseq
    %v569 = vshrl.u32 %v568, 7
    %v570 = vsub.s32 1, %v569
    %v571 = vrot.slane %v551, %v570
    %v572 = vlaneseq
    %v573 = vshrl.u32 %v572, 7
    %v574 = vsub.s32 1, %v573
    %v575 = vrot.slane %v555, %v574
    %v576 = vlaneseq
    %v577 = vshrl.u32 %v576, 7
    %v578 = vsub.s32 1, %v577
    %v579 = vrot.slane %v559, %v578
    %v580 = vmul.f32 %v540, %v567
    %v581 = vmul.f32 %v541, %v571
    %v582 = vmul.f32 %v542, %v575
    %v583 = vmul.f32 %v543, %v579
    %v584 = vadd.f32 %v580, %v581
    %v585 = vadd.f32 %v584, %v582
    %v586 = vadd.f32 %v585, %v583
    %587 = vadd.xlane.f32.xlu0 %v586
    %v588 = vpop.xlane.xlu0 %587
    %s589 = sld [smem:[#allocation2]]
    %v590 = vstv %s589
    %v591 = vadd.f32 %v588, %v590
    %v592 = vxor.u32 %v591, 2147483648
    %v593 = vmul.f32 %v592, 1.442695
    %v594 = vpow.pop %v593
    %v595 = vadd.f32 %v594, 1.0
    %v596 = vrcp.pop %v595
    %v597 = vmul.f32 1.0, %v596
    %v598 = vmul.f32 %v33, %v597
    %v599 = vmul.f32 %v34, %v597
    %600 = vst [vmem:[%s4] sm:$0xff] %v598
    %601 = vst [vmem:[%s4 + $0x8] sm:$0xff] %v599
    // Predicated region
    $region22: #{slam_forward.1} parent=1 // pred_check
      _
    $region23: #{slam_forward.1} parent=1 // pred_check_branch
      %603 = sbr.rel (0) target = $region25
    $region24: #{slam_forward.1} parent=1 // pred_region
      _
    $region25: #{slam_forward.1} parent=1 // pred_fallthru
      _
    // Predicated region
    $region26: #{slam_forward.1} parent=1 // pred_check
      _
    $region27: #{slam_forward.1} parent=1 // pred_check_branch
      %605 = sbr.rel (0) target = $region29
    $region28: #{slam_forward.1} parent=1 // pred_region
      _
    $region29: #{slam_forward.1} parent=1 // pred_fallthru
      _
    %606 = vsyncpa [#allocation4], 1

</llo_original>
